<compile_context>
chip_gen: v7x
topology: tpu7x:2x2x1
jax: 0.10.0
libtpu: 0.0.40
codegen_flags: <defaults>
</compile_context>

<pallas_src>
import jax
import jax.numpy as jnp
from jax.experimental import pallas as pl
from jax.experimental.pallas import tpu as pltpu


def _hbm_copy_kernel(z_hbm_ref, o_hbm_ref, copy_sem):
    # Single-hop HBM->HBM DMA: no VMEM staging, no vreg round trip, no
    # vector load/store slots consumed.  Works for any shape/dtype since no
    # BlockSpec tiling (and hence no (8,128) constraint) is involved.
    cp = pltpu.make_async_copy(z_hbm_ref, o_hbm_ref, copy_sem)
    cp.start()
    cp.wait()


def _materialized_identity_pallas(z2d):
    """Materialized identity copy via direct HBM->HBM DMA.  z2d: (B, D)."""
    B, D = z2d.shape
    itemsize = jnp.dtype(z2d.dtype).itemsize
    return pl.pallas_call(
        _hbm_copy_kernel,
        out_shape=jax.ShapeDtypeStruct((B, D), z2d.dtype),
        in_specs=[pl.BlockSpec(memory_space=pl.ANY)],   # stay in HBM
        out_specs=pl.BlockSpec(memory_space=pl.ANY),    # allocate in HBM
        scratch_shapes=[pltpu.SemaphoreType.DMA],       # DMA completion sem
        cost_estimate=pl.CostEstimate(
            flops=0,
            transcendentals=0,
            bytes_accessed=2 * B * D * itemsize,
        ),
    )(z2d)


class FlowLayer:
    """JAX/Pallas port of CategoricalNF FlowLayer (abstract flow base class)."""

    def __init__(self):
        pass  # no parameters in the base class

    def forward(self, z, ldj=None, reverse=False, materialize=False, **kwargs):
        # Base-class contract realized as the identity flow (ldj += 0).
        # `reverse` is plumbed through for subclasses; for the identity flow
        # both directions are the same transform.
        del reverse
        B = z.shape[0]
        if ldj is None:
            ldj = jnp.zeros((B,), dtype=jnp.float32)

        if not materialize:
            # Fast path: the identity flow is mathematically free.  Do NOT
            # launch a kernel; 0 bytes of HBM traffic.
            return z, ldj

        # Materialized copy (template for subclasses / explicit buffer copy).
        orig_shape = z.shape
        z2d = z.reshape(B, -1)                 # native dtype, no casts
        z_out = _materialized_identity_pallas(z2d)
        return z_out.reshape(orig_shape), ldj

    def reverse(self, z, ldj=None, **kwargs):
        return self.forward(z, ldj, reverse=True, **kwargs)

    def need_data_init(self):
        return False

    def data_init_forward(self, input_data, **kwargs):
        raise NotImplementedError

    def info(self):
        return "FlowLayer (identity / abstract base, Pallas TPU HBM-DMA template)"


if __name__ == "__main__":
    key = jax.random.PRNGKey(0)
    k1, k2 = jax.random.split(key)
    # NCHW input consistent with conv-style flow layers.
    z = jax.random.normal(k1, (2, 4, 16, 16), dtype=jnp.float32)
    ldj = jax.random.normal(k2, (2,), dtype=jnp.float32)

    layer = FlowLayer()

    # --- Fast path (default): no kernel launch, identity semantics. ---
    z_fast, ldj_fast = layer.forward(z, ldj)
    jax.block_until_ready((z_fast, ldj_fast))
    assert z_fast.shape == z.shape and z_fast.dtype == z.dtype
    assert bool(jnp.allclose(z_fast, z))
    assert bool(jnp.allclose(ldj_fast, ldj))

    # --- Materialized-copy Pallas kernel (the subclass template): run once. ---
    z_out, ldj_out = layer.forward(z, ldj, materialize=True)
    jax.block_until_ready((z_out, ldj_out))
    assert z_out.shape == z.shape and z_out.dtype == z.dtype
    assert ldj_out.shape == (2,)
    assert bool(jnp.allclose(z_out, z))
    assert bool(jnp.allclose(ldj_out, ldj))
    assert layer.need_data_init() is False

    # reverse dispatch path.
    z_rev, ldj_rev = layer.reverse(z, ldj)
    jax.block_until_ready((z_rev, ldj_rev))
    assert bool(jnp.allclose(z_rev, z))
    assert bool(jnp.allclose(ldj_rev, ldj))

    # ldj=None default path.
    z_def, ldj_def = layer.forward(z)
    jax.block_until_ready((z_def, ldj_def))
    assert bool(jnp.allclose(ldj_def, jnp.zeros((2,), jnp.float32)))

    # bf16 path exercises the native-dtype DMA copy (no upcast).
    z_bf16 = z.astype(jnp.bfloat16)
    z_bf16_out, _ = layer.forward(z_bf16, ldj, materialize=True)
    jax.block_until_ready(z_bf16_out)
    assert z_bf16_out.dtype == jnp.bfloat16
    assert bool(jnp.all(z_bf16_out == z_bf16))

    print("KERNEL_OK")
</pallas_src>

<mosaic_0001>
module attributes {stable_mosaic.version = 11 : i64} {
  func.func @_hbm_copy_kernel(%arg0: memref<2x1024xf32, #tpu.memory_space<any>>, %arg1: memref<2x1024xf32, #tpu.memory_space<any>>, %arg2: memref<!tpu.dma_semaphore, #tpu.memory_space<semaphore_mem>>) attributes {dimension_semantics = [], scalar_prefetch = 0 : i64, scratch_operands = 1 : i64, tpu.core_type = #tpu.core_type<tc>} {
    tpu.enqueue_dma source(%arg0 : memref<2x1024xf32, #tpu.memory_space<any>>) target(%arg1 : memref<2x1024xf32, #tpu.memory_space<any>>) target_semaphore(%arg2 : memref<!tpu.dma_semaphore, #tpu.memory_space<semaphore_mem>>)
    tpu.wait_dma2 semaphore(%arg2 : memref<!tpu.dma_semaphore, #tpu.memory_space<semaphore_mem>>) src(%arg0 : memref<2x1024xf32, #tpu.memory_space<any>>) dst(%arg1 : memref<2x1024xf32, #tpu.memory_space<any>>)
    return
  }
}

</mosaic_0001>

<llo_original>
// kernel: tpu_custom_call.1
$region0: #{tpu_custom_call.1}
  #allocation0 [shape = 'u32[]', space=smem, size = 0x4, offset = 0x4, fixed_abs, tag = 'smem constant byte address 0x4 - core index']
  #allocation1 [shape = 'u32[144,128]{1,0:T(1,128)}', space=vmem, size = 0x12000, scoped, tag = 'internal scratch']
  #allocation2 [shape = 's32[1]{0}', space=sflag, size = 0x4, scoped, tag = 'scratch operand']
  #allocation3 [shape = 's32[]', space=sflag, size = 0x4, offset = 0, fixed_abs, tag = 'sflag constant byte address 0x0 - dummy sync flag']
  #allocation4 [shape = 'u32[0]{0}', space=smem, size = 0, offset = 0, fixed_abs, tag = 'smem constant byte address 0x0 - null']
  %s0 = inlined_call_operand.hbm [shape: f32[2,1024], index: 0, kind: input, shape index: {}]
  %s1 = inlined_call_operand.hbm [shape: f32[2,1024], index: 1, kind: output, shape index: {}]
  %s2 = sld [smem:[#allocation0]]
  $region2: #{tpu_custom_call.1} parent=0
    _
  %s4 = ssub.s32 1, %s2
  %s5 = scalar_select 0, %s4, %s2
  %s7 = sshll.u32 1, 14
  %s8 = sxor.u32 4294967295, %s7
  %s11 = sshll.u32 3, 24
  %s12 = sxor.u32 4294967295, %s11
  %s13 = sand.u32 0, %s12
  %s15 = sor.u32 %s13, 0
  %18 = dma.general %s0, 256, %s1, [#allocation2], [#allocation3], [#allocation4], %s15, 0
  %s19 = smul.u32 2, 1
  %s20 = smul.u32 %s19, 8
  %s21 = sshll.u32 %s20, 4
  %22 = dma.done [#allocation2], %s21
  %23 = vsyncmov [#allocation2]
  %s24 = vpop.sfrf %23
  %p25 = scmp.eq.s32.totalorder %s24, 0
  %p26 = pneg %p25
  %28 = shalt.err (%p26)

</llo_original>
